<compile_context>
chip_gen: v7x
topology: tpu7x:2x2x1
jax: 0.10.0
libtpu: 0.0.40
codegen_flags: <defaults>
</compile_context>

<pallas_src>
import jax
import jax.numpy as jnp
from jax.experimental import pallas as pl
from jax.experimental.pallas import tpu as pltpu

LANE = 128
MAX_TILE_M = 2048


def _round_up(n, m):
    return ((n + m - 1) // m) * m


def _pick_tile_m(batch, max_tile=MAX_TILE_M):
    """Batch-tile rows: big tiles for HBM streaming, >=2 tiles whenever the batch
    allows (so both v7x TensorCores get work), tiny serving batches stay single-tile."""
    m8 = _round_up(max(batch, 1), 8)
    if m8 < 16:
        return m8  # tiny per-env-step batch: one tile, zero row padding
    n_tiles = max(2, pl.cdiv(m8, max_tile))
    return _round_up(pl.cdiv(m8, n_tiles), 8)


def actor_net_kernel(x_ref, w_ref, b_ref, out_ref):
    """One batch tile through the whole 4-layer MLP.

    x_ref:   (TILE_M, state_dim) f32   raw (lane-unpadded) input tile
    w_ref:   (4, P, P)           bf16  packed, zero-padded [in, out] weights (VMEM-resident)
    b_ref:   (4, 1, P)           f32   packed, zero-padded biases (VMEM-resident)
    out_ref: (TILE_M, a_dim)     f32   narrow output tile (only the live lanes)
    """
    n_layers = w_ref.shape[0]
    state_dim = x_ref.shape[1]
    a_dim = out_ref.shape[1]

    # Layer 1: cast the f32 tile to bf16 for the MXU and contract only over the
    # live K = state_dim rows of the padded weight slab.
    h = x_ref[...].astype(w_ref.dtype)
    z = jnp.dot(h, w_ref[0, :state_dim, :],
                preferred_element_type=jnp.float32) + b_ref[0]
    h = jnp.maximum(z, 0.0).astype(w_ref.dtype)

    # Hidden layers: zero-padded weight columns + zero padded bias keep the padded
    # lanes exactly 0 through every bias+ReLU, so they never leak into later matmuls.
    for i in range(1, n_layers - 1):
        z = jnp.dot(h, w_ref[i], preferred_element_type=jnp.float32) + b_ref[i]
        h = jnp.maximum(z, 0.0).astype(w_ref.dtype)

    # Output layer: matmul + bias + sigmoid (f32 on the EUP); store only the a_dim live lanes.
    z = jnp.dot(h, w_ref[n_layers - 1],
                preferred_element_type=jnp.float32) + b_ref[n_layers - 1]
    out_ref[...] = jax.nn.sigmoid(z[:, :a_dim])


def actor_net_forward(x, w_packed, b_packed, a_dim):
    """x: [batch, state_dim] float32. Returns [batch, a_dim] float32."""
    batch, state_dim = x.shape
    n_layers, p, _ = w_packed.shape

    tile_m = _pick_tile_m(batch)
    m_pad = _round_up(batch, tile_m)
    # Pad rows only (and only when needed); no lane padding / dtype cast in the wrapper.
    x_in = x if m_pad == batch else jnp.pad(x, ((0, m_pad - batch), (0, 0)))

    out = pl.pallas_call(
        actor_net_kernel,
        out_shape=jax.ShapeDtypeStruct((m_pad, a_dim), jnp.float32),
        grid=(m_pad // tile_m,),
        in_specs=[
            # Streamed raw-f32 batch tile (last dim == full array dim: legal block).
            pl.BlockSpec((tile_m, state_dim), lambda i: (i, 0)),
            # Constant index_map -> weight/bias slabs fetched once, VMEM-resident.
            pl.BlockSpec((n_layers, p, p), lambda i: (0, 0, 0)),
            pl.BlockSpec((n_layers, 1, p), lambda i: (0, 0, 0)),
        ],
        out_specs=pl.BlockSpec((tile_m, a_dim), lambda i: (i, 0)),
        compiler_params=pltpu.CompilerParams(
            dimension_semantics=("parallel",),  # batch tiles split across v7x's 2 TCs
        ),
    )(x_in, w_packed, b_packed)

    return out if m_pad == batch else out[:batch]


def init_actor_net_params(key, state_dim, a_dim, *, param_dtype=jnp.bfloat16):
    """Mirror the PyTorch init (weights ~ N(0, 0.1), biases = 0.1), stored as [in, out]
    and packed into zero-padded 128-lane slabs.

    Returns (w_slab [4,P,P] bf16, b_slab [4,1,P] f32, raw list of (w, b) unpadded).
    """
    dims = [(state_dim, 100), (100, 50), (50, 30), (30, a_dim)]
    p = _round_up(max(max(din, dout) for din, dout in dims), LANE)

    keys = jax.random.split(key, len(dims))
    w_slab = jnp.zeros((len(dims), p, p), param_dtype)
    b_slab = jnp.zeros((len(dims), 1, p), jnp.float32)
    raw = []
    for i, ((din, dout), k) in enumerate(zip(dims, keys)):
        w = (0.1 * jax.random.normal(k, (din, dout), dtype=jnp.float32)).astype(param_dtype)
        b = jnp.full((dout,), 0.1, dtype=jnp.float32)
        w_slab = w_slab.at[i, :din, :dout].set(w)
        b_slab = b_slab.at[i, 0, :dout].set(b)
        raw.append((w, b))
    return w_slab, b_slab, raw


if __name__ == "__main__":
    key = jax.random.PRNGKey(0)
    k_x, k_p = jax.random.split(key)

    state_dim = 32
    a_dim = 16
    w_packed, b_packed, raw = init_actor_net_params(k_p, state_dim, a_dim)

    def reference(x):
        # Pure-JAX reference using the exact same bf16-weight / f32-accumulation recipe.
        h = x.astype(w_packed.dtype)
        for i in range(3):
            w, b = raw[i]
            h = jnp.maximum(
                jnp.dot(h, w, preferred_element_type=jnp.float32) + b, 0.0
            ).astype(w_packed.dtype)
        w, b = raw[3]
        return jax.nn.sigmoid(jnp.dot(h, w, preferred_element_type=jnp.float32) + b)

    # batch=8  -> tiny single-tile serving path (grid=(1,), no row padding).
    # batch=40 -> multi-tile path (2 tiles of 24 rows, row padding + "parallel" grid).
    for batch in (8, 40):
        x = jax.random.normal(k_x, (batch, state_dim), dtype=jnp.float32)
        out = actor_net_forward(x, w_packed, b_packed, a_dim)
        jax.block_until_ready(out)

        ref = reference(x)
        assert out.shape == (batch, a_dim)
        assert jnp.allclose(out, ref, atol=1e-3, rtol=1e-3), (
            f"batch={batch}: max abs err {jnp.max(jnp.abs(out - ref))}")

    print("KERNEL_OK")
</pallas_src>

<mosaic_0001>
module attributes {stable_mosaic.version = 11 : i64} {
  func.func @actor_net_kernel(%arg0: i32, %arg1: memref<8x32xf32, #tpu.memory_space<vmem>>, %arg2: memref<4x128x128xbf16, #tpu.memory_space<vmem>>, %arg3: memref<4x1x128xf32, #tpu.memory_space<vmem>>, %arg4: memref<8x16xf32, #tpu.memory_space<vmem>>) attributes {dimension_semantics = [#tpu.dimension_semantics<parallel>], iteration_bounds = array<i64: 1>, scalar_prefetch = 0 : i64, scratch_operands = 0 : i64, tpu.core_type = #tpu.core_type<tc>, window_params = [{transform_indices = @transform_0, window_bounds = array<i64: 8, 32>}, {pipeline_mode = #tpu.pipeline_mode<synchronous>, transform_indices = @transform_1, window_bounds = array<i64: 4, 128, 128>}, {pipeline_mode = #tpu.pipeline_mode<synchronous>, transform_indices = @transform_2, window_bounds = array<i64: 4, 1, 128>}, {transform_indices = @transform_3, window_bounds = array<i64: 8, 16>}]} {
    %c0 = arith.constant 0 : index
    %c0_0 = arith.constant 0 : index
    %0 = vector.load %arg1[%c0, %c0_0] : memref<8x32xf32, #tpu.memory_space<vmem>>, vector<8x32xf32>
    %1 = arith.truncf %0 : vector<8x32xf32> to vector<8x32xbf16>
    %c0_1 = arith.constant 0 : index
    %c0_2 = arith.constant 0 : index
    %c0_3 = arith.constant 0 : index
    %2 = vector.load %arg2[%c0_1, %c0_2, %c0_3] : memref<4x128x128xbf16, #tpu.memory_space<vmem>>, vector<1x32x128xbf16>
    %3 = vector.shape_cast %2 : vector<1x32x128xbf16> to vector<32x128xbf16>
    %cst = arith.constant dense<0.000000e+00> : vector<8x128xf32>
    %4 = tpu.matmul %1, %3, %cst {dimension_numbers = #tpu.dot_dimension_numbers<[1], [0], [0], [1], [0, 0, 1, 1], [], []>} : vector<8x32xbf16>, vector<32x128xbf16>, vector<8x128xf32> -> vector<8x128xf32>
    %c0_4 = arith.constant 0 : index
    %c0_5 = arith.constant 0 : index
    %c0_6 = arith.constant 0 : index
    %5 = vector.load %arg3[%c0_4, %c0_5, %c0_6] : memref<4x1x128xf32, #tpu.memory_space<vmem>>, vector<1x1x128xf32>
    %6 = vector.shape_cast %5 : vector<1x1x128xf32> to vector<1x128xf32>
    %7 = vector.broadcast %6 : vector<1x128xf32> to vector<8x128xf32>
    %8 = arith.addf %4, %7 : vector<8x128xf32>
    %cst_7 = arith.constant 0.000000e+00 : f32
    %9 = vector.broadcast %cst_7 : f32 to vector<8x128xf32>
    %10 = arith.maximumf %8, %9 : vector<8x128xf32>
    %11 = arith.truncf %10 : vector<8x128xf32> to vector<8x128xbf16>
    %c1 = arith.constant 1 : index
    %c0_8 = arith.constant 0 : index
    %c0_9 = arith.constant 0 : index
    %12 = vector.load %arg2[%c1, %c0_8, %c0_9] : memref<4x128x128xbf16, #tpu.memory_space<vmem>>, vector<1x128x128xbf16>
    %13 = vector.shape_cast %12 : vector<1x128x128xbf16> to vector<128x128xbf16>
    %cst_10 = arith.constant dense<0.000000e+00> : vector<8x128xf32>
    %14 = tpu.matmul %11, %13, %cst_10 {dimension_numbers = #tpu.dot_dimension_numbers<[1], [0], [0], [1], [0, 0, 1, 1], [], []>} : vector<8x128xbf16>, vector<128x128xbf16>, vector<8x128xf32> -> vector<8x128xf32>
    %c1_11 = arith.constant 1 : index
    %c0_12 = arith.constant 0 : index
    %c0_13 = arith.constant 0 : index
    %15 = vector.load %arg3[%c1_11, %c0_12, %c0_13] : memref<4x1x128xf32, #tpu.memory_space<vmem>>, vector<1x1x128xf32>
    %16 = vector.shape_cast %15 : vector<1x1x128xf32> to vector<1x128xf32>
    %17 = vector.broadcast %16 : vector<1x128xf32> to vector<8x128xf32>
    %18 = arith.addf %14, %17 : vector<8x128xf32>
    %cst_14 = arith.constant 0.000000e+00 : f32
    %19 = vector.broadcast %cst_14 : f32 to vector<8x128xf32>
    %20 = arith.maximumf %18, %19 : vector<8x128xf32>
    %21 = arith.truncf %20 : vector<8x128xf32> to vector<8x128xbf16>
    %c2 = arith.constant 2 : index
    %c0_15 = arith.constant 0 : index
    %c0_16 = arith.constant 0 : index
    %22 = vector.load %arg2[%c2, %c0_15, %c0_16] : memref<4x128x128xbf16, #tpu.memory_space<vmem>>, vector<1x128x128xbf16>
    %23 = vector.shape_cast %22 : vector<1x128x128xbf16> to vector<128x128xbf16>
    %cst_17 = arith.constant dense<0.000000e+00> : vector<8x128xf32>
    %24 = tpu.matmul %21, %23, %cst_17 {dimension_numbers = #tpu.dot_dimension_numbers<[1], [0], [0], [1], [0, 0, 1, 1], [], []>} : vector<8x128xbf16>, vector<128x128xbf16>, vector<8x128xf32> -> vector<8x128xf32>
    %c2_18 = arith.constant 2 : index
    %c0_19 = arith.constant 0 : index
    %c0_20 = arith.constant 0 : index
    %25 = vector.load %arg3[%c2_18, %c0_19, %c0_20] : memref<4x1x128xf32, #tpu.memory_space<vmem>>, vector<1x1x128xf32>
    %26 = vector.shape_cast %25 : vector<1x1x128xf32> to vector<1x128xf32>
    %27 = vector.broadcast %26 : vector<1x128xf32> to vector<8x128xf32>
    %28 = arith.addf %24, %27 : vector<8x128xf32>
    %cst_21 = arith.constant 0.000000e+00 : f32
    %29 = vector.broadcast %cst_21 : f32 to vector<8x128xf32>
    %30 = arith.maximumf %28, %29 : vector<8x128xf32>
    %31 = arith.truncf %30 : vector<8x128xf32> to vector<8x128xbf16>
    %c3 = arith.constant 3 : index
    %c0_22 = arith.constant 0 : index
    %c0_23 = arith.constant 0 : index
    %32 = vector.load %arg2[%c3, %c0_22, %c0_23] : memref<4x128x128xbf16, #tpu.memory_space<vmem>>, vector<1x128x128xbf16>
    %33 = vector.shape_cast %32 : vector<1x128x128xbf16> to vector<128x128xbf16>
    %cst_24 = arith.constant dense<0.000000e+00> : vector<8x128xf32>
    %34 = tpu.matmul %31, %33, %cst_24 {dimension_numbers = #tpu.dot_dimension_numbers<[1], [0], [0], [1], [0, 0, 1, 1], [], []>} : vector<8x128xbf16>, vector<128x128xbf16>, vector<8x128xf32> -> vector<8x128xf32>
    %c3_25 = arith.constant 3 : index
    %c0_26 = arith.constant 0 : index
    %c0_27 = arith.constant 0 : index
    %35 = vector.load %arg3[%c3_25, %c0_26, %c0_27] : memref<4x1x128xf32, #tpu.memory_space<vmem>>, vector<1x1x128xf32>
    %36 = vector.shape_cast %35 : vector<1x1x128xf32> to vector<1x128xf32>
    %37 = vector.broadcast %36 : vector<1x128xf32> to vector<8x128xf32>
    %38 = arith.addf %34, %37 : vector<8x128xf32>
    %39 = vector.extract_strided_slice %38 {offsets = [0, 0], sizes = [8, 16], strides = [1, 1]} : vector<8x128xf32> to vector<8x16xf32>
    %40 = arith.negf %39 : vector<8x16xf32>
    %41 = math.exp %40 : vector<8x16xf32>
    %cst_28 = arith.constant 1.000000e+00 : f32
    %42 = vector.broadcast %cst_28 : f32 to vector<8x16xf32>
    %43 = arith.addf %42, %41 : vector<8x16xf32>
    %44 = arith.divf %42, %43 : vector<8x16xf32>
    %c0_29 = arith.constant 0 : index
    %c0_30 = arith.constant 0 : index
    %45 = vector.load %arg4[%c0_29, %c0_30] : memref<8x16xf32, #tpu.memory_space<vmem>>, vector<8x16xf32>
    tpu.vector_store %arg4[%c0_29, %c0_30], %44 {strides = array<i32>} : memref<8x16xf32, #tpu.memory_space<vmem>>, vector<8x16xf32>,
    return
  }
  func.func @transform_0(%arg0: i32) -> (i32, i32) {
    %c0_i32 = arith.constant 0 : i32
    %c0_i32_0 = arith.constant 0 : i32
    return %arg0, %c0_i32 : i32, i32
  }
  func.func @transform_1(%arg0: i32) -> (i32, i32, i32) {
    %c0_i32 = arith.constant 0 : i32
    %c0_i32_0 = arith.constant 0 : i32
    %c0_i32_1 = arith.constant 0 : i32
    %c0_i32_2 = arith.constant 0 : i32
    return %c0_i32, %c0_i32_0, %c0_i32_1 : i32, i32, i32
  }
  func.func @transform_2(%arg0: i32) -> (i32, i32, i32) {
    %c0_i32 = arith.constant 0 : i32
    %c0_i32_0 = arith.constant 0 : i32
    %c0_i32_1 = arith.constant 0 : i32
    %c0_i32_2 = arith.constant 0 : i32
    return %c0_i32, %c0_i32_0, %c0_i32_1 : i32, i32, i32
  }
  func.func @transform_3(%arg0: i32) -> (i32, i32) {
    %c0_i32 = arith.constant 0 : i32
    %c0_i32_0 = arith.constant 0 : i32
    return %arg0, %c0_i32 : i32, i32
  }
}

</mosaic_0001>

<llo_original>
// kernel: tpu_custom_call.1
$region0: #{tpu_custom_call.1}
  #allocation0 [shape = 'u32[]', space=smem, size = 0x4, offset = 0x4, fixed_abs, tag = 'smem constant byte address 0x4 - core index']
  #allocation1 [shape = 'u32[144,128]{1,0:T(1,128)}', space=vmem, size = 0x12000, scoped, tag = 'internal scratch']
  %s0 = inlined_call_operand.hbm [shape: f32[8,32], index: 0, kind: input, shape index: {}]
  %s1 = inlined_call_operand.hbm [shape: bf16[4,128,128], index: 1, kind: input, shape index: {}]
  %s2 = inlined_call_operand.vmem [shape: f32[4,1,128], index: 2, kind: input, shape index: {}]
  %s3 = inlined_call_operand.hbm [shape: f32[8,16], index: 3, kind: output, shape index: {}]
  %s4 = sld [smem:[#allocation0]]
  $region30: #{tpu_custom_call.1} parent=0
    _
  %s6 = ssub.s32 1, %s4
  %s7 = scalar_select 0, %s6, %s4
  $region1: #{tpu_custom_call.1} parent=0
    #allocation2 [shape = 'u8[4096]{0}', space=vmem, size = 0x1000, scoped, tag = 'input window, operand 0, single buffered']
    #allocation3 [shape = 's32[1]{0}', space=sflag, size = 0x4, scoped, tag = 'scoped memory for tpu_custom_call.1']
    #allocation4 [shape = 's32[1]{0}', space=sflag, size = 0x4, scoped, tag = 'scoped memory for tpu_custom_call.1']
    #allocation5 [shape = 'u8[131072]{0}', space=vmem, size = 0x20000, scoped, tag = 'input window, operand 1, single buffered']
    #allocation6 [shape = 's32[1]{0}', space=sflag, size = 0x4, scoped, tag = 'scoped memory for tpu_custom_call.1']
    #allocation7 [shape = 'u8[4096]{0}', space=vmem, size = 0x1000, scoped, tag = 'output window, operand 0, single buffered']
    %8 = vsyncpa [#allocation3], 0
    %9 = vsyncpa [#allocation6], 0
    %10 = vsyncpa [#allocation4], 0
    // Predicated region
    $region2: #{tpu_custom_call.1} parent=1 // pred_check
      _
    $region3: #{tpu_custom_call.1} parent=1 // pred_check_branch
      %12 = sbr.rel (0) target = $region5
    $region4: #{tpu_custom_call.1} parent=1 // pred_region
      %s14 = ssub.s32 128, 128
      %15 = vsyncadd [#allocation3], %s14
      %s17 = sshll.u32 [#allocation2], 4
      %s18 = int_to_ptr.vmem [resolvable:$true] %s17
      %20 = dma.hbm_to_vmem [thread:$0]  %s0, 128, %s18, [#allocation3]
    $region5: #{tpu_custom_call.1} parent=1 // pred_fallthru
      _
    // Predicated region
    $region6: #{tpu_custom_call.1} parent=1 // pred_check
      _
    $region7: #{tpu_custom_call.1} parent=1 // pred_check_branch
      %22 = sbr.rel (0) target = $region9
    $region8: #{tpu_custom_call.1} parent=1 // pred_region
      %s24 = ssub.s32 4096, 4096
      %25 = vsyncadd [#allocation6], %s24
      %s26 = sshll.u32 [#allocation5], 4
      %s27 = int_to_ptr.vmem [resolvable:$true] %s26
      %32 = dma.hbm_to_vmem [thread:$0]  %s1, 4096, %s27, [#allocation6], 64, 64, 4
    $region9: #{tpu_custom_call.1} parent=1 // pred_fallthru
      _
    // Predicated region
    $region10: #{tpu_custom_call.1} parent=1 // pred_check
      _
    $region11: #{tpu_custom_call.1} parent=1 // pred_check_branch
      %34 = sbr.rel (0) target = $region13
    $region12: #{tpu_custom_call.1} parent=1 // pred_region
      _
    $region13: #{tpu_custom_call.1} parent=1 // pred_fallthru
      _
    // Predicated region
    $region14: #{tpu_custom_call.1} parent=1 // pred_check
      _
    $region15: #{tpu_custom_call.1} parent=1 // pred_check_branch
      %36 = sbr.rel (0) target = $region17
    $region16: #{tpu_custom_call.1} parent=1 // pred_region
      %37 = dma.done [#allocation3], 128
    $region17: #{tpu_custom_call.1} parent=1 // pred_fallthru
      _
    // Predicated region
    $region18: #{tpu_custom_call.1} parent=1 // pred_check
      _
    $region19: #{tpu_custom_call.1} parent=1 // pred_check_branch
      %39 = sbr.rel (0) target = $region21
    $region20: #{tpu_custom_call.1} parent=1 // pred_region
      %40 = dma.done [#allocation6], 4096
    $region21: #{tpu_custom_call.1} parent=1 // pred_fallthru
      _
    %v42 = vld [vmem:[#allocation2] sm:$0xff]
    %v43 = vpack.c.bf16 %v42, %v42
    %v44 = vld [vmem:[#allocation5] sm:$0xf]
    %v45 = vld [vmem:[#allocation5 + $0x4] sm:$0xf]
    %v46 = vld [vmem:[#allocation5 + $0x8] sm:$0xf]
    %v47 = vld [vmem:[#allocation5 + $0xc] sm:$0xf]
    %v48 = vld [vmem:[%s2] sm:$0x1]
    %v50 = vlaneseq
    %v51 = vshrl.u32 %v50, 7
    %v52 = vsub.s32 0, %v51
    %v53 = vrot.slane %v48, %v52
    %v59 = vunpack.c.l.b16 %v44
    %v60 = vunpack.c.l.b16 %v45
    %v61 = vunpack.c.l.b16 %v46
    %v62 = vunpack.c.l.b16 %v47
    %v63 = vpack.c.b16 %v60, %v59
    %v64 = vpack.c.b16 %v62, %v61
    %vm67 = vcmask 261120
    %v69 = vsel %vm67, %v43, 0
    %71 = vmatprep.subr.bf16.mxu0 0
    %72 = vmatpush1.bf16.msra.mxu0 %v63
    %73 = vmatprep.subr.bf16.mxu0 0
    %74 = vmatpush1.bf16.msra.mxu0 %v64
    %75 = vmatprep.subr.bf16.mxu0 0
    %76 = vmatpush1.bf16.msra.mxu0 0
    %77 = vmatprep.subr.bf16.mxu0 0
    %78 = vmatpush1.bf16.msra.mxu0 0
    %79 = vmatprep.subr.bf16.mxu0 0
    %80 = vmatpush1.bf16.msra.mxu0 0
    %81 = vmatprep.subr.bf16.mxu0 0
    %82 = vmatpush1.bf16.msra.mxu0 0
    %83 = vmatprep.subr.bf16.mxu0 0
    %84 = vmatpush1.bf16.msra.mxu0 0
    %85 = vmatprep.subr.bf16.mxu0 0
    %86 = vmatpush1.bf16.msra.mxu0 0
    %87 = vmatprep.subr.bf16.mxu0 0
    %88 = vmatpush1.bf16.msra.mxu0 0
    %89 = vmatprep.subr.bf16.mxu0 0
    %90 = vmatpush1.bf16.msra.mxu0 0
    %91 = vmatprep.subr.bf16.mxu0 0
    %92 = vmatpush1.bf16.msra.mxu0 0
    %93 = vmatprep.subr.bf16.mxu0 0
    %94 = vmatpush1.bf16.msra.mxu0 0
    %95 = vmatprep.subr.bf16.mxu0 0
    %96 = vmatpush1.bf16.msra.mxu0 0
    %97 = vmatprep.subr.bf16.mxu0 0
    %98 = vmatpush1.bf16.msra.mxu0 0
    %99 = vmatprep.subr.bf16.mxu0 0
    %100 = vmatpush1.bf16.msra.mxu0 0
    %101 = vmatprep.subr.bf16.mxu0 0
    %102 = vmatpush1.bf16.msra.mxu0 0
    %103 = vmatprep.mubr.bf16.mxu0 0
    %104 = vmatmul.mubr.bf16.gmra.mrb[0].mxu0 %v69
    %v105 = vpop.f32.mrb[0].mxu0
    %v106 = vadd.f32 %v53, %v105
    %v107 = vpop.f32.mrb[0].mxu0
    %v108 = vpop.f32.mrb[0].mxu0
    %v109 = vpop.f32.mrb[0].mxu0
    %110 = vdwg.mxu0
    %v111 = vmax.f32 %v106, 0.0
    %v112 = vpack.c.bf16 %v111, %v111
    %s113 = scalar_lea.vmem [#allocation5], 64
    %v114 = vld [vmem:[%s113] sm:$0xf]
    %v115 = vld [vmem:[%s113 + $0x4] sm:$0xf]
    %v116 = vld [vmem:[%s113 + $0x8] sm:$0xf]
    %v117 = vld [vmem:[%s113 + $0xc] sm:$0xf]
    %v118 = vld [vmem:[%s113 + $0x10] sm:$0xf]
    %v119 = vld [vmem:[%s113 + $0x14] sm:$0xf]
    %v120 = vld [vmem:[%s113 + $0x18] sm:$0xf]
    %v121 = vld [vmem:[%s113 + $0x1c] sm:$0xf]
    %v122 = vld [vmem:[%s113 + $0x20] sm:$0xf]
    %v123 = vld [vmem:[%s113 + $0x24] sm:$0xf]
    %v124 = vld [vmem:[%s113 + $0x28] sm:$0xf]
    %v125 = vld [vmem:[%s113 + $0x2c] sm:$0xf]
    %v126 = vld [vmem:[%s113 + $0x30] sm:$0xf]
    %v127 = vld [vmem:[%s113 + $0x34] sm:$0xf]
    %v128 = vld [vmem:[%s113 + $0x38] sm:$0xf]
    %v129 = vld [vmem:[%s113 + $0x3c] sm:$0xf]
    %s130 = scalar_lea.vmem %s2, 1
    %v131 = vld [vmem:[%s130] sm:$0x1]
    %v133 = vlaneseq
    %v134 = vshrl.u32 %v133, 7
    %v135 = vsub.s32 0, %v134
    %v136 = vrot.slane %v131, %v135
    %v154 = vunpack.c.l.b16 %v114
    %v155 = vunpack.c.l.b16 %v115
    %v156 = vunpack.c.l.b16 %v116
    %v157 = vunpack.c.l.b16 %v117
    %v158 = vunpack.c.l.b16 %v118
    %v159 = vunpack.c.l.b16 %v119
    %v160 = vunpack.c.l.b16 %v120
    %v161 = vunpack.c.l.b16 %v121
    %v162 = vunpack.c.l.b16 %v122
    %v163 = vunpack.c.l.b16 %v123
    %v164 = vunpack.c.l.b16 %v124
    %v165 = vunpack.c.l.b16 %v125
    %v166 = vunpack.c.l.b16 %v126
    %v167 = vunpack.c.l.b16 %v127
    %v168 = vunpack.c.l.b16 %v128
    %v169 = vunpack.c.l.b16 %v129
    %v170 = vpack.c.b16 %v155, %v154
    %v171 = vpack.c.b16 %v157, %v156
    %v172 = vpack.c.b16 %v159, %v158
    %v173 = vpack.c.b16 %v161, %v160
    %v174 = vpack.c.b16 %v163, %v162
    %v175 = vpack.c.b16 %v165, %v164
    %v176 = vpack.c.b16 %v167, %v166
    %v177 = vpack.c.b16 %v169, %v168
    %186 = vmatprep.subr.bf16.mxu0 0
    %187 = vmatpush1.bf16.msra.mxu0 %v170
    %188 = vmatprep.subr.bf16.mxu0 0
    %189 = vmatpush1.bf16.msra.mxu0 %v171
    %190 = vmatprep.subr.bf16.mxu0 0
    %191 = vmatpush1.bf16.msra.mxu0 %v172
    %192 = vmatprep.subr.bf16.mxu0 0
    %193 = vmatpush1.bf16.msra.mxu0 %v173
    %194 = vmatprep.subr.bf16.mxu0 0
    %195 = vmatpush1.bf16.msra.mxu0 %v174
    %196 = vmatprep.subr.bf16.mxu0 0
    %197 = vmatpush1.bf16.msra.mxu0 %v175
    %198 = vmatprep.subr.bf16.mxu0 0
    %199 = vmatpush1.bf16.msra.mxu0 %v176
    %200 = vmatprep.subr.bf16.mxu0 0
    %201 = vmatpush1.bf16.msra.mxu0 %v177
    %202 = vmatprep.subr.bf16.mxu0 0
    %203 = vmatpush1.bf16.msra.mxu0 0
    %204 = vmatprep.subr.bf16.mxu0 0
    %205 = vmatpush1.bf16.msra.mxu0 0
    %206 = vmatprep.subr.bf16.mxu0 0
    %207 = vmatpush1.bf16.msra.mxu0 0
    %208 = vmatprep.subr.bf16.mxu0 0
    %209 = vmatpush1.bf16.msra.mxu0 0
    %210 = vmatprep.subr.bf16.mxu0 0
    %211 = vmatpush1.bf16.msra.mxu0 0
    %212 = vmatprep.subr.bf16.mxu0 0
    %213 = vmatpush1.bf16.msra.mxu0 0
    %214 = vmatprep.subr.bf16.mxu0 0
    %215 = vmatpush1.bf16.msra.mxu0 0
    %216 = vmatprep.subr.bf16.mxu0 0
    %217 = vmatpush1.bf16.msra.mxu0 0
    %218 = vmatprep.mubr.bf16.mxu0 0
    %219 = vmatmul.mubr.bf16.gmra.mrb[0].mxu0 %v112
    %v220 = vpop.f32.mrb[0].mxu0
    %v221 = vadd.f32 %v136, %v220
    %v222 = vpop.f32.mrb[0].mxu0
    %v223 = vpop.f32.mrb[0].mxu0
    %v224 = vpop.f32.mrb[0].mxu0
    %225 = vdwg.mxu0
    %v226 = vmax.f32 %v221, 0.0
    %v227 = vpack.c.bf16 %v226, %v226
    %s228 = scalar_lea.vmem [#allocation5], 128
    %v229 = vld [vmem:[%s228] sm:$0xf]
    %v230 = vld [vmem:[%s228 + $0x4] sm:$0xf]
    %v231 = vld [vmem:[%s228 + $0x8] sm:$0xf]
    %v232 = vld [vmem:[%s228 + $0xc] sm:$0xf]
    %v233 = vld [vmem:[%s228 + $0x10] sm:$0xf]
    %v234 = vld [vmem:[%s228 + $0x14] sm:$0xf]
    %v235 = vld [vmem:[%s228 + $0x18] sm:$0xf]
    %v236 = vld [vmem:[%s228 + $0x1c] sm:$0xf]
    %v237 = vld [vmem:[%s228 + $0x20] sm:$0xf]
    %v238 = vld [vmem:[%s228 + $0x24] sm:$0xf]
    %v239 = vld [vmem:[%s228 + $0x28] sm:$0xf]
    %v240 = vld [vmem:[%s228 + $0x2c] sm:$0xf]
    %v241 = vld [vmem:[%s228 + $0x30] sm:$0xf]
    %v242 = vld [vmem:[%s228 + $0x34] sm:$0xf]
    %v243 = vld [vmem:[%s228 + $0x38] sm:$0xf]
    %v244 = vld [vmem:[%s228 + $0x3c] sm:$0xf]
    %s245 = scalar_lea.vmem %s2, 2
    %v246 = vld [vmem:[%s245] sm:$0x1]
    %v248 = vlaneseq
    %v249 = vshrl.u32 %v248, 7
    %v250 = vsub.s32 0, %v249
    %v251 = vrot.slane %v246, %v250
    %v269 = vunpack.c.l.b16 %v229
    %v270 = vunpack.c.l.b16 %v230
    %v271 = vunpack.c.l.b16 %v231
    %v272 = vunpack.c.l.b16 %v232
    %v273 = vunpack.c.l.b16 %v233
    %v274 = vunpack.c.l.b16 %v234
    %v275 = vunpack.c.l.b16 %v235
    %v276 = vunpack.c.l.b16 %v236
    %v277 = vunpack.c.l.b16 %v237
    %v278 = vunpack.c.l.b16 %v238
    %v279 = vunpack.c.l.b16 %v239
    %v280 = vunpack.c.l.b16 %v240
    %v281 = vunpack.c.l.b16 %v241
    %v282 = vunpack.c.l.b16 %v242
    %v283 = vunpack.c.l.b16 %v243
    %v284 = vunpack.c.l.b16 %v244
    %v285 = vpack.c.b16 %v270, %v269
    %v286 = vpack.c.b16 %v272, %v271
    %v287 = vpack.c.b16 %v274, %v273
    %v288 = vpack.c.b16 %v276, %v275
    %v289 = vpack.c.b16 %v278, %v277
    %v290 = vpack.c.b16 %v280, %v279
    %v291 = vpack.c.b16 %v282, %v281
    %v292 = vpack.c.b16 %v284, %v283
    %301 = vmatprep.subr.bf16.mxu0 0
    %302 = vmatpush1.bf16.msra.mxu0 %v285
    %303 = vmatprep.subr.bf16.mxu0 0
    %304 = vmatpush1.bf16.msra.mxu0 %v286
    %305 = vmatprep.subr.bf16.mxu0 0
    %306 = vmatpush1.bf16.msra.mxu0 %v287
    %307 = vmatprep.subr.bf16.mxu0 0
    %308 = vmatpush1.bf16.msra.mxu0 %v288
    %309 = vmatprep.subr.bf16.mxu0 0
    %310 = vmatpush1.bf16.msra.mxu0 %v289
    %311 = vmatprep.subr.bf16.mxu0 0
    %312 = vmatpush1.bf16.msra.mxu0 %v290
    %313 = vmatprep.subr.bf16.mxu0 0
    %314 = vmatpush1.bf16.msra.mxu0 %v291
    %315 = vmatprep.subr.bf16.mxu0 0
    %316 = vmatpush1.bf16.msra.mxu0 %v292
    %317 = vmatprep.subr.bf16.mxu0 0
    %318 = vmatpush1.bf16.msra.mxu0 0
    %319 = vmatprep.subr.bf16.mxu0 0
    %320 = vmatpush1.bf16.msra.mxu0 0
    %321 = vmatprep.subr.bf16.mxu0 0
    %322 = vmatpush1.bf16.msra.mxu0 0
    %323 = vmatprep.subr.bf16.mxu0 0
    %324 = vmatpush1.bf16.msra.mxu0 0
    %325 = vmatprep.subr.bf16.mxu0 0
    %326 = vmatpush1.bf16.msra.mxu0 0
    %327 = vmatprep.subr.bf16.mxu0 0
    %328 = vmatpush1.bf16.msra.mxu0 0
    %329 = vmatprep.subr.bf16.mxu0 0
    %330 = vmatpush1.bf16.msra.mxu0 0
    %331 = vmatprep.subr.bf16.mxu0 0
    %332 = vmatpush1.bf16.msra.mxu0 0
    %333 = vmatprep.mubr.bf16.mxu0 0
    %334 = vmatmul.mubr.bf16.gmra.mrb[0].mxu0 %v227
    %v335 = vpop.f32.mrb[0].mxu0
    %v336 = vadd.f32 %v251, %v335
    %v337 = vpop.f32.mrb[0].mxu0
    %v338 = vpop.f32.mrb[0].mxu0
    %v339 = vpop.f32.mrb[0].mxu0
    %340 = vdwg.mxu0
    %v341 = vmax.f32 %v336, 0.0
    %v342 = vpack.c.bf16 %v341, %v341
    %s343 = scalar_lea.vmem [#allocation5], 192
    %v344 = vld [vmem:[%s343] sm:$0xf]
    %v345 = vld [vmem:[%s343 + $0x4] sm:$0xf]
    %v346 = vld [vmem:[%s343 + $0x8] sm:$0xf]
    %v347 = vld [vmem:[%s343 + $0xc] sm:$0xf]
    %v348 = vld [vmem:[%s343 + $0x10] sm:$0xf]
    %v349 = vld [vmem:[%s343 + $0x14] sm:$0xf]
    %v350 = vld [vmem:[%s343 + $0x18] sm:$0xf]
    %v351 = vld [vmem:[%s343 + $0x1c] sm:$0xf]
    %v352 = vld [vmem:[%s343 + $0x20] sm:$0xf]
    %v353 = vld [vmem:[%s343 + $0x24] sm:$0xf]
    %v354 = vld [vmem:[%s343 + $0x28] sm:$0xf]
    %v355 = vld [vmem:[%s343 + $0x2c] sm:$0xf]
    %v356 = vld [vmem:[%s343 + $0x30] sm:$0xf]
    %v357 = vld [vmem:[%s343 + $0x34] sm:$0xf]
    %v358 = vld [vmem:[%s343 + $0x38] sm:$0xf]
    %v359 = vld [vmem:[%s343 + $0x3c] sm:$0xf]
    %s360 = scalar_lea.vmem %s2, 3
    %v361 = vld [vmem:[%s360] sm:$0x1]
    %v363 = vlaneseq
    %v364 = vshrl.u32 %v363, 7
    %v365 = vsub.s32 0, %v364
    %v366 = vrot.slane %v361, %v365
    %v384 = vunpack.c.l.b16 %v344
    %v385 = vunpack.c.l.b16 %v345
    %v386 = vunpack.c.l.b16 %v346
    %v387 = vunpack.c.l.b16 %v347
    %v388 = vunpack.c.l.b16 %v348
    %v389 = vunpack.c.l.b16 %v349
    %v390 = vunpack.c.l.b16 %v350
    %v391 = vunpack.c.l.b16 %v351
    %v392 = vunpack.c.l.b16 %v352
    %v393 = vunpack.c.l.b16 %v353
    %v394 = vunpack.c.l.b16 %v354
    %v395 = vunpack.c.l.b16 %v355
    %v396 = vunpack.c.l.b16 %v356
    %v397 = vunpack.c.l.b16 %v357
    %v398 = vunpack.c.l.b16 %v358
    %v399 = vunpack.c.l.b16 %v359
    %v400 = vpack.c.b16 %v385, %v384
    %v401 = vpack.c.b16 %v387, %v386
    %v402 = vpack.c.b16 %v389, %v388
    %v403 = vpack.c.b16 %v391, %v390
    %v404 = vpack.c.b16 %v393, %v392
    %v405 = vpack.c.b16 %v395, %v394
    %v406 = vpack.c.b16 %v397, %v396
    %v407 = vpack.c.b16 %v399, %v398
    %416 = vmatprep.subr.bf16.mxu0 0
    %417 = vmatpush1.bf16.msra.mxu0 %v400
    %418 = vmatprep.subr.bf16.mxu0 0
    %419 = vmatpush1.bf16.msra.mxu0 %v401
    %420 = vmatprep.subr.bf16.mxu0 0
    %421 = vmatpush1.bf16.msra.mxu0 %v402
    %422 = vmatprep.subr.bf16.mxu0 0
    %423 = vmatpush1.bf16.msra.mxu0 %v403
    %424 = vmatprep.subr.bf16.mxu0 0
    %425 = vmatpush1.bf16.msra.mxu0 %v404
    %426 = vmatprep.subr.bf16.mxu0 0
    %427 = vmatpush1.bf16.msra.mxu0 %v405
    %428 = vmatprep.subr.bf16.mxu0 0
    %429 = vmatpush1.bf16.msra.mxu0 %v406
    %430 = vmatprep.subr.bf16.mxu0 0
    %431 = vmatpush1.bf16.msra.mxu0 %v407
    %432 = vmatprep.subr.bf16.mxu0 0
    %433 = vmatpush1.bf16.msra.mxu0 0
    %434 = vmatprep.subr.bf16.mxu0 0
    %435 = vmatpush1.bf16.msra.mxu0 0
    %436 = vmatprep.subr.bf16.mxu0 0
    %437 = vmatpush1.bf16.msra.mxu0 0
    %438 = vmatprep.subr.bf16.mxu0 0
    %439 = vmatpush1.bf16.msra.mxu0 0
    %440 = vmatprep.subr.bf16.mxu0 0
    %441 = vmatpush1.bf16.msra.mxu0 0
    %442 = vmatprep.subr.bf16.mxu0 0
    %443 = vmatpush1.bf16.msra.mxu0 0
    %444 = vmatprep.subr.bf16.mxu0 0
    %445 = vmatpush1.bf16.msra.mxu0 0
    %446 = vmatprep.subr.bf16.mxu0 0
    %447 = vmatpush1.bf16.msra.mxu0 0
    %448 = vmatprep.mubr.bf16.mxu0 0
    %449 = vmatmul.mubr.bf16.gmra.mrb[0].mxu0 %v342
    %v450 = vpop.f32.mrb[0].mxu0
    %v451 = vadd.f32 %v366, %v450
    %v452 = vpop.f32.mrb[0].mxu0
    %v453 = vpop.f32.mrb[0].mxu0
    %v454 = vpop.f32.mrb[0].mxu0
    %455 = vdwg.mxu0
    %v456 = vxor.u32 %v451, 2147483648
    %v457 = vmul.f32 %v456, 1.442695
    %v458 = vpow.pop %v457
    %v459 = vadd.f32 %v458, 1.0
    %v460 = vrcp.pop %v459
    %v461 = vmul.f32 1.0, %v460
    %vm462 = vcmask 130048
    %463 = vst.msk [vmem:[#allocation7] sm:$0xff] %vm462, %v461
    // Predicated region
    $region22: #{tpu_custom_call.1} parent=1 // pred_check
      _
    $region23: #{tpu_custom_call.1} parent=1 // pred_check_branch
      %465 = sbr.rel (0) target = $region25
    $region24: #{tpu_custom_call.1} parent=1 // pred_region
      %s467 = ssub.s32 128, 128
      %468 = vsyncadd [#allocation4], %s467
      %s470 = sshll.u32 [#allocation7], 4
      %s471 = int_to_ptr.vmem [resolvable:$true] %s470
      %473 = dma.vmem_to_hbm [thread:$0]  %s471, 128, %s3, [#allocation4]
    $region25: #{tpu_custom_call.1} parent=1 // pred_fallthru
      _
    // Predicated region
    $region26: #{tpu_custom_call.1} parent=1 // pred_check
      _
    $region27: #{tpu_custom_call.1} parent=1 // pred_check_branch
      %475 = sbr.rel (0) target = $region29
    $region28: #{tpu_custom_call.1} parent=1 // pred_region
      %476 = dma.done [#allocation4], 128
    $region29: #{tpu_custom_call.1} parent=1 // pred_fallthru
      _
    %477 = vsyncpa [#allocation3], 1
    %478 = vsyncpa [#allocation6], 1
    %479 = vsyncpa [#allocation4], 1

</llo_original>
